<compile_context>
chip_gen: v5e
topology: v5e:2x2
jax: 0.10.0
libtpu: 0.0.40
codegen_flags: <defaults>
</compile_context>

<pallas_src>
import functools
import math

import jax
import jax.numpy as jnp
from jax.experimental import pallas as pl
from jax.experimental.pallas import tpu as pltpu


def _attention_kernel(x_ref, wq_ref, bq_ref, wkv_ref, bkv_ref, o_ref,
                      q_scr, acc_scr, *, T, TK, k_size, inv_sqrt_k):
    # x_ref:   (1, T, D)        wq_ref: (D, k)       bq_ref:  (1, k)
    # wkv_ref: (D, k + v)       bkv_ref:(1, k + v)   o_ref:   (1, T, D)
    # q_scr:   (T, k) f32       acc_scr:(T, v) f32
    jk = pl.program_id(1)

    @pl.when(jk == 0)
    def _():
        # Fused Q projection, computed once per batch element, cached in VMEM.
        q_scr[...] = (
            jnp.dot(x_ref[0], wq_ref[...], preferred_element_type=jnp.float32)
            + bq_ref[...])
        acc_scr[...] = jnp.zeros_like(acc_scr)

    # K/V projection for this key tile only, as ONE deep-contraction matmul.
    start = pl.multiple_of(jk * TK, TK)
    x_tile = x_ref[0, pl.ds(start, TK), :]                        # (TK, D)
    kv = (jnp.dot(x_tile, wkv_ref[...], preferred_element_type=jnp.float32)
          + bkv_ref[...])                                         # (TK, k+v)
    k_tile = kv[:, :k_size]                                       # (TK, k)
    v_tile = kv[:, k_size:]                                       # (TK, v)

    # Logits tile (T, TK): rows = query index i, cols = global key index j.
    logits = jnp.dot(q_scr[...], k_tile.T, preferred_element_type=jnp.float32)

    # Strict upper-triangular causal mask: j > i -> -inf.
    row_ids = jax.lax.broadcasted_iota(jnp.int32, (T, TK), 0)
    col_ids = jax.lax.broadcasted_iota(jnp.int32, (T, TK), 1) + jk * TK
    logits = jnp.where(col_ids <= row_ids, logits, -jnp.inf)

    # Softmax over the QUERY axis (dim=1 of the (B, T, T) logits in PyTorch),
    # i.e. per key column -> each column is complete within one key tile.
    m = jnp.max(logits, axis=0, keepdims=True)                    # (1, TK)
    e = jnp.exp(logits - m)                                       # masked -> 0
    s = jnp.sum(e, axis=0, keepdims=True)                         # (1, TK)
    probs = e * (inv_sqrt_k / s)                                  # softmax / sqrt(k)

    # Partial read for this key tile, accumulated in f32 scratch.
    acc_scr[...] += jnp.dot(probs, v_tile, preferred_element_type=jnp.float32)

    @pl.when(jk == pl.num_programs(1) - 1)
    def _():
        # Fused residual add; single lane-dense HBM writeback per batch element.
        o_ref[0] = (x_ref[0] + acc_scr[...]).astype(o_ref.dtype)


def attention_block_forward(x, wq, bq, wk, bk, wv, bv, *, key_tile=None):
    """x: (B, T, D).  wq/wk: (k_size, D), wv: (v_size, D) (torch nn.Linear layout),
    bq/bk: (k_size,), bv: (v_size,).  The module's residual requires v_size == D."""
    B, T, D = x.shape
    k_size = wq.shape[0]
    v_size = wv.shape[0]
    assert wq.shape == (k_size, D) and wk.shape == (k_size, D)
    assert wv.shape == (v_size, D) and bv.shape == (v_size,)
    assert v_size == D, "residual add in AttentionBlock requires v_size == dims"

    if key_tile is None:
        key_tile = T
        for cand in (512, 256, 128, 64, 32, 16, 8):
            if T % cand == 0:
                key_tile = cand
                break
    assert T % key_tile == 0
    n_key_tiles = T // key_tile

    # Pre-transpose to matmul layout and fuse K/V weights so the per-tile
    # projection is a single deep-contraction MXU matmul.
    wq_t = jnp.transpose(wq)                                       # (D, k)
    wkv_t = jnp.concatenate(
        [jnp.transpose(wk), jnp.transpose(wv)], axis=1)            # (D, k+v)
    bq_r = bq.reshape(1, k_size)
    bkv_r = jnp.concatenate([bk, bv]).reshape(1, k_size + v_size)

    kernel = functools.partial(
        _attention_kernel, T=T, TK=key_tile, k_size=k_size,
        inv_sqrt_k=1.0 / math.sqrt(k_size))

    flops = (2 * B * T * D * (2 * k_size + v_size)     # Q + fused K/V projections
             + 2 * B * T * T * k_size                  # logits
             + 2 * B * T * T * v_size)                 # read
    bytes_accessed = 4 * (2 * B * T * D                # x in + out
                          + D * (2 * k_size + v_size)  # weights
                          + 2 * k_size + v_size)       # biases

    return pl.pallas_call(
        kernel,
        out_shape=jax.ShapeDtypeStruct((B, T, D), x.dtype),
        grid_spec=pltpu.PrefetchScalarGridSpec(
            num_scalar_prefetch=0,
            grid=(B, n_key_tiles),
            in_specs=[
                pl.BlockSpec((1, T, D), lambda b, jk: (b, 0, 0)),
                pl.BlockSpec((D, k_size), lambda b, jk: (0, 0)),
                pl.BlockSpec((1, k_size), lambda b, jk: (0, 0)),
                pl.BlockSpec((D, k_size + v_size), lambda b, jk: (0, 0)),
                pl.BlockSpec((1, k_size + v_size), lambda b, jk: (0, 0)),
            ],
            out_specs=pl.BlockSpec((1, T, D), lambda b, jk: (b, 0, 0)),
            scratch_shapes=[
                pltpu.VMEM((T, k_size), jnp.float32),   # cached Q projection
                pltpu.VMEM((T, v_size), jnp.float32),   # read accumulator
            ],
        ),
        compiler_params=pltpu.CompilerParams(
            dimension_semantics=("parallel", "arbitrary"),
        ),
        cost_estimate=pl.CostEstimate(
            flops=flops, transcendentals=B * T * T,
            bytes_accessed=bytes_accessed),
    )(x, wq_t, bq_r, wkv_t, bkv_r)


def _reference_forward(x, wq, bq, wk, bk, wv, bv):
    """Pure-JAX reference matching the PyTorch module exactly."""
    hi = jax.lax.Precision.HIGHEST
    queries = jnp.einsum("btd,kd->btk", x, wq, precision=hi) + bq
    keys = jnp.einsum("btd,kd->btk", x, wk, precision=hi) + bk
    values = jnp.einsum("btd,vd->btv", x, wv, precision=hi) + bv
    logits = jnp.einsum("btk,bsk->bts", queries, keys, precision=hi)
    T = x.shape[1]
    i = jnp.arange(T)[:, None]
    j = jnp.arange(T)[None, :]
    logits = jnp.where(j > i, -jnp.inf, logits)
    probs = jax.nn.softmax(logits, axis=1) / math.sqrt(wq.shape[0])
    read = jnp.einsum("bts,bsv->btv", probs, values, precision=hi)
    return x + read


if __name__ == "__main__":
    # Small but lane-dense shapes: last dims are multiples of 128 so stores and
    # MXU tiles are unmasked. v_size == dims is required by the residual add.
    B, T, D = 2, 16, 128
    K_SIZE, V_SIZE = 128, 128

    key = jax.random.PRNGKey(0)
    kx, kqw, kqb, kkw, kkb, kvw, kvb = jax.random.split(key, 7)

    x = jax.random.normal(kx, (B, T, D), dtype=jnp.float32)

    # Deterministic init mimicking nn.Linear default (uniform +/- 1/sqrt(fan_in)).
    bound = 1.0 / math.sqrt(D)
    wq = jax.random.uniform(kqw, (K_SIZE, D), minval=-bound, maxval=bound, dtype=jnp.float32)
    bq = jax.random.uniform(kqb, (K_SIZE,), minval=-bound, maxval=bound, dtype=jnp.float32)
    wk = jax.random.uniform(kkw, (K_SIZE, D), minval=-bound, maxval=bound, dtype=jnp.float32)
    bk = jax.random.uniform(kkb, (K_SIZE,), minval=-bound, maxval=bound, dtype=jnp.float32)
    wv = jax.random.uniform(kvw, (V_SIZE, D), minval=-bound, maxval=bound, dtype=jnp.float32)
    bv = jax.random.uniform(kvb, (V_SIZE,), minval=-bound, maxval=bound, dtype=jnp.float32)

    # key_tile=8 forces two key tiles so the cross-tile accumulation path runs.
    out = attention_block_forward(x, wq, bq, wk, bk, wv, bv, key_tile=8)
    out = jax.block_until_ready(out)

    ref = _reference_forward(x, wq, bq, wk, bk, wv, bv)
    assert out.shape == (B, T, D)
    max_err = float(jnp.max(jnp.abs(out - ref)))
    assert jnp.allclose(out, ref, atol=2e-3, rtol=2e-3), max_err

    print("KERNEL_OK")
</pallas_src>

<mosaic_0001>
module attributes {stable_mosaic.version = 11 : i64} {
  func.func @_attention_kernel(%arg0: i32, %arg1: i32, %arg2: memref<1x16x128xf32, #tpu.memory_space<vmem>>, %arg3: memref<128x128xf32, #tpu.memory_space<vmem>>, %arg4: memref<1x128xf32, #tpu.memory_space<vmem>>, %arg5: memref<128x256xf32, #tpu.memory_space<vmem>>, %arg6: memref<1x256xf32, #tpu.memory_space<vmem>>, %arg7: memref<1x16x128xf32, #tpu.memory_space<vmem>>, %arg8: memref<16x128xf32, #tpu.memory_space<vmem>>, %arg9: memref<16x128xf32, #tpu.memory_space<vmem>>) attributes {dimension_semantics = [#tpu.dimension_semantics<parallel>, #tpu.dimension_semantics<arbitrary>], iteration_bounds = array<i64: 2, 2>, scalar_prefetch = 0 : i64, scratch_operands = 2 : i64, tpu.core_type = #tpu.core_type<tc>, window_params = [{transform_indices = @transform_0, window_bounds = array<i64: 1, 16, 128>}, {pipeline_mode = #tpu.pipeline_mode<synchronous>, transform_indices = @transform_1, window_bounds = array<i64: 128, 128>}, {pipeline_mode = #tpu.pipeline_mode<synchronous>, transform_indices = @transform_2, window_bounds = array<i64: 1, 128>}, {pipeline_mode = #tpu.pipeline_mode<synchronous>, transform_indices = @transform_3, window_bounds = array<i64: 128, 256>}, {pipeline_mode = #tpu.pipeline_mode<synchronous>, transform_indices = @transform_4, window_bounds = array<i64: 1, 256>}, {transform_indices = @transform_5, window_bounds = array<i64: 1, 16, 128>}]} {
    %c0_i32 = arith.constant 0 : i32
    %0 = arith.cmpi eq, %arg1, %c0_i32 : i32
    %1 = arith.extui %0 : i1 to i32
    %c0_i32_0 = arith.constant 0 : i32
    %2 = arith.cmpi ne, %1, %c0_i32_0 : i32
    scf.if %2 {
      %c0_20 = arith.constant 0 : index
      %c0_21 = arith.constant 0 : index
      %c0_22 = arith.constant 0 : index
      %44 = vector.load %arg2[%c0_20, %c0_21, %c0_22] : memref<1x16x128xf32, #tpu.memory_space<vmem>>, vector<1x16x128xf32>
      %45 = vector.shape_cast %44 : vector<1x16x128xf32> to vector<16x128xf32>
      %c0_23 = arith.constant 0 : index
      %c0_24 = arith.constant 0 : index
      %46 = vector.load %arg3[%c0_23, %c0_24] : memref<128x128xf32, #tpu.memory_space<vmem>>, vector<128x128xf32>
      %cst_25 = arith.constant dense<0.000000e+00> : vector<16x128xf32>
      %47 = tpu.matmul %45, %46, %cst_25 {dimension_numbers = #tpu.dot_dimension_numbers<[1], [0], [0], [1], [0, 0, 1, 1], [], []>} : vector<16x128xf32>, vector<128x128xf32>, vector<16x128xf32> -> vector<16x128xf32>
      %c0_26 = arith.constant 0 : index
      %c0_27 = arith.constant 0 : index
      %48 = vector.load %arg4[%c0_26, %c0_27] : memref<1x128xf32, #tpu.memory_space<vmem>>, vector<1x128xf32>
      %49 = vector.broadcast %48 : vector<1x128xf32> to vector<16x128xf32>
      %50 = arith.addf %47, %49 : vector<16x128xf32>
      %c0_28 = arith.constant 0 : index
      %c0_29 = arith.constant 0 : index
      %51 = vector.load %arg8[%c0_28, %c0_29] : memref<16x128xf32, #tpu.memory_space<vmem>>, vector<16x128xf32>
      tpu.vector_store %arg8[%c0_28, %c0_29], %50 {strides = array<i32>} : memref<16x128xf32, #tpu.memory_space<vmem>>, vector<16x128xf32>,
      %cst_30 = arith.constant 0.000000e+00 : f32
      %52 = vector.broadcast %cst_30 : f32 to vector<16x128xf32>
      %c0_31 = arith.constant 0 : index
      %c0_32 = arith.constant 0 : index
      %53 = vector.load %arg9[%c0_31, %c0_32] : memref<16x128xf32, #tpu.memory_space<vmem>>, vector<16x128xf32>
      tpu.vector_store %arg9[%c0_31, %c0_32], %52 {strides = array<i32>} : memref<16x128xf32, #tpu.memory_space<vmem>>, vector<16x128xf32>,
    } else {
    }
    %c8_i32 = arith.constant 8 : i32
    %3 = arith.muli %arg1, %c8_i32 : i32
    %4 = tpu.assume_multiple %3, 8 : i32
    %c0 = arith.constant 0 : index
    %5 = arith.index_cast %4 : i32 to index
    %c0_1 = arith.constant 0 : index
    %6 = vector.load %arg2[%c0, %5, %c0_1] : memref<1x16x128xf32, #tpu.memory_space<vmem>>, vector<1x8x128xf32>
    %7 = vector.shape_cast %6 : vector<1x8x128xf32> to vector<8x128xf32>
    %c0_2 = arith.constant 0 : index
    %c0_3 = arith.constant 0 : index
    %8 = vector.load %arg5[%c0_2, %c0_3] : memref<128x256xf32, #tpu.memory_space<vmem>>, vector<128x256xf32>
    %cst = arith.constant dense<0.000000e+00> : vector<8x256xf32>
    %9 = tpu.matmul %7, %8, %cst {dimension_numbers = #tpu.dot_dimension_numbers<[1], [0], [0], [1], [0, 0, 1, 1], [], []>} : vector<8x128xf32>, vector<128x256xf32>, vector<8x256xf32> -> vector<8x256xf32>
    %c0_4 = arith.constant 0 : index
    %c0_5 = arith.constant 0 : index
    %10 = vector.load %arg6[%c0_4, %c0_5] : memref<1x256xf32, #tpu.memory_space<vmem>>, vector<1x256xf32>
    %11 = vector.broadcast %10 : vector<1x256xf32> to vector<8x256xf32>
    %12 = arith.addf %9, %11 : vector<8x256xf32>
    %13 = vector.extract_strided_slice %12 {offsets = [0, 0], sizes = [8, 128], strides = [1, 1]} : vector<8x256xf32> to vector<8x128xf32>
    %14 = vector.extract_strided_slice %12 {offsets = [0, 128], sizes = [8, 128], strides = [1, 1]} : vector<8x256xf32> to vector<8x128xf32>
    %c0_6 = arith.constant 0 : index
    %c0_7 = arith.constant 0 : index
    %15 = vector.load %arg8[%c0_6, %c0_7] : memref<16x128xf32, #tpu.memory_space<vmem>>, vector<16x128xf32>
    %16 = tpu.transpose %13, [1, 0] : vector<8x128xf32> -> vector<128x8xf32>
    %cst_8 = arith.constant dense<0.000000e+00> : vector<16x8xf32>
    %17 = tpu.matmul %15, %16, %cst_8 {dimension_numbers = #tpu.dot_dimension_numbers<[1], [0], [0], [1], [0, 0, 1, 1], [], []>} : vector<16x128xf32>, vector<128x8xf32>, vector<16x8xf32> -> vector<16x8xf32>
    %18 = tpu.iota {dimensions = array<i32: 0>} : vector<16x8xi32>
    %19 = tpu.iota {dimensions = array<i32: 1>} : vector<16x8xi32>
    %c8_i32_9 = arith.constant 8 : i32
    %20 = arith.muli %arg1, %c8_i32_9 : i32
    %21 = vector.broadcast %20 : i32 to vector<16x8xi32>
    %22 = arith.addi %19, %21 : vector<16x8xi32>
    %23 = arith.cmpi sle, %22, %18 : vector<16x8xi32>
    %cst_10 = arith.constant 0xFF800000 : f32
    %24 = vector.broadcast %cst_10 : f32 to vector<16x8xf32>
    %25 = arith.select %23, %17, %24 : vector<16x8xi1>, vector<16x8xf32>
    %cst_11 = arith.constant dense<0xFF800000> : vector<8xf32>
    %26 = vector.multi_reduction <maximumf>, %25, %cst_11 [0] : vector<16x8xf32> to vector<8xf32>
    %27 = vector.shape_cast %26 : vector<8xf32> to vector<1x8xf32>
    %28 = vector.broadcast %27 : vector<1x8xf32> to vector<16x8xf32>
    %29 = arith.subf %25, %28 : vector<16x8xf32>
    %30 = math.exp %29 : vector<16x8xf32>
    %cst_12 = arith.constant dense<0.000000e+00> : vector<8xf32>
    %31 = vector.multi_reduction <add>, %30, %cst_12 [0] : vector<16x8xf32> to vector<8xf32>
    %32 = vector.shape_cast %31 : vector<8xf32> to vector<1x8xf32>
    %cst_13 = arith.constant 0.0883883461 : f32
    %33 = vector.broadcast %cst_13 : f32 to vector<1x8xf32>
    %34 = arith.divf %33, %32 : vector<1x8xf32>
    %35 = vector.broadcast %34 : vector<1x8xf32> to vector<16x8xf32>
    %36 = arith.mulf %30, %35 : vector<16x8xf32>
    %c0_14 = arith.constant 0 : index
    %c0_15 = arith.constant 0 : index
    %37 = vector.load %arg9[%c0_14, %c0_15] : memref<16x128xf32, #tpu.memory_space<vmem>>, vector<16x128xf32>
    %cst_16 = arith.constant dense<0.000000e+00> : vector<16x128xf32>
    %38 = tpu.matmul %36, %14, %cst_16 {dimension_numbers = #tpu.dot_dimension_numbers<[1], [0], [0], [1], [0, 0, 1, 1], [], []>} : vector<16x8xf32>, vector<8x128xf32>, vector<16x128xf32> -> vector<16x128xf32>
    %39 = arith.addf %37, %38 : vector<16x128xf32>
    %c0_17 = arith.constant 0 : index
    %c0_18 = arith.constant 0 : index
    %40 = vector.load %arg9[%c0_17, %c0_18] : memref<16x128xf32, #tpu.memory_space<vmem>>, vector<16x128xf32>
    tpu.vector_store %arg9[%c0_17, %c0_18], %39 {strides = array<i32>} : memref<16x128xf32, #tpu.memory_space<vmem>>, vector<16x128xf32>,
    %c1_i32 = arith.constant 1 : i32
    %41 = arith.cmpi eq, %arg1, %c1_i32 : i32
    %42 = arith.extui %41 : i1 to i32
    %c0_i32_19 = arith.constant 0 : i32
    %43 = arith.cmpi ne, %42, %c0_i32_19 : i32
    scf.if %43 {
      %c0_20 = arith.constant 0 : index
      %c0_21 = arith.constant 0 : index
      %c0_22 = arith.constant 0 : index
      %44 = vector.load %arg2[%c0_20, %c0_21, %c0_22] : memref<1x16x128xf32, #tpu.memory_space<vmem>>, vector<1x16x128xf32>
      %45 = vector.shape_cast %44 : vector<1x16x128xf32> to vector<16x128xf32>
      %c0_23 = arith.constant 0 : index
      %c0_24 = arith.constant 0 : index
      %46 = vector.load %arg9[%c0_23, %c0_24] : memref<16x128xf32, #tpu.memory_space<vmem>>, vector<16x128xf32>
      %47 = arith.addf %45, %46 : vector<16x128xf32>
      %c0_25 = arith.constant 0 : index
      %c0_26 = arith.constant 0 : index
      %c0_27 = arith.constant 0 : index
      %48 = vector.load %arg7[%c0_25, %c0_26, %c0_27] : memref<1x16x128xf32, #tpu.memory_space<vmem>>, vector<1x16x128xf32>
      %49 = vector.shape_cast %48 : vector<1x16x128xf32> to vector<16x128xf32>
      %50 = vector.shape_cast %47 : vector<16x128xf32> to vector<1x16x128xf32>
      tpu.vector_store %arg7[%c0_25, %c0_26, %c0_27], %50 {strides = array<i32>} : memref<1x16x128xf32, #tpu.memory_space<vmem>>, vector<1x16x128xf32>,
    } else {
    }
    return
  }
  func.func @transform_0(%arg0: i32, %arg1: i32) -> (i32, i32, i32) {
    %c0_i32 = arith.constant 0 : i32
    %c0_i32_0 = arith.constant 0 : i32
    %c0_i32_1 = arith.constant 0 : i32
    return %arg0, %c0_i32, %c0_i32_0 : i32, i32, i32
  }
  func.func @transform_1(%arg0: i32, %arg1: i32) -> (i32, i32) {
    %c0_i32 = arith.constant 0 : i32
    %c0_i32_0 = arith.constant 0 : i32
    %c0_i32_1 = arith.constant 0 : i32
    return %c0_i32, %c0_i32_0 : i32, i32
  }
  func.func @transform_2(%arg0: i32, %arg1: i32) -> (i32, i32) {
    %c0_i32 = arith.constant 0 : i32
    %c0_i32_0 = arith.constant 0 : i32
    %c0_i32_1 = arith.constant 0 : i32
    return %c0_i32, %c0_i32_0 : i32, i32
  }
  func.func @transform_3(%arg0: i32, %arg1: i32) -> (i32, i32) {
    %c0_i32 = arith.constant 0 : i32
    %c0_i32_0 = arith.constant 0 : i32
    %c0_i32_1 = arith.constant 0 : i32
    return %c0_i32, %c0_i32_0 : i32, i32
  }
  func.func @transform_4(%arg0: i32, %arg1: i32) -> (i32, i32) {
    %c0_i32 = arith.constant 0 : i32
    %c0_i32_0 = arith.constant 0 : i32
    %c0_i32_1 = arith.constant 0 : i32
    return %c0_i32, %c0_i32_0 : i32, i32
  }
  func.func @transform_5(%arg0: i32, %arg1: i32) -> (i32, i32, i32) {
    %c0_i32 = arith.constant 0 : i32
    %c0_i32_0 = arith.constant 0 : i32
    %c0_i32_1 = arith.constant 0 : i32
    return %arg0, %c0_i32, %c0_i32_0 : i32, i32, i32
  }
}

</mosaic_0001>

<llo_original>
// kernel: tpu_custom_call.1
$region0: #{tpu_custom_call.1}
  #allocation0 [shape = 'u32[]', space=smem, size = 0x4, offset = 0x4, fixed_abs, tag = 'smem constant byte address 0x4 - core index']
  #allocation1 [shape = 'u32[72,128]{1,0:T(1,128)}', space=vmem, size = 0x9000, scoped, tag = 'internal scratch']
  #allocation2 [shape = 'f32[16,128]{1,0:T(8,128)}', space=vmem, size = 0x2000, scoped, tag = 'scratch operand']
  #allocation3 [shape = 'f32[16,128]{1,0:T(8,128)}', space=vmem, size = 0x2000, scoped, tag = 'scratch operand']
  %s0 = inlined_call_operand.hbm [shape: f32[2,16,128], index: 0, kind: input, shape index: {}]
  %s1 = inlined_call_operand.hbm [shape: f32[128,128], index: 1, kind: input, shape index: {}]
  %s2 = inlined_call_operand.vmem [shape: f32[1,128], index: 2, kind: input, shape index: {}]
  %s3 = inlined_call_operand.hbm [shape: f32[128,256], index: 3, kind: input, shape index: {}]
  %s4 = inlined_call_operand.vmem [shape: f32[1,256], index: 4, kind: input, shape index: {}]
  %s5 = inlined_call_operand.hbm [shape: f32[2,16,128], index: 5, kind: output, shape index: {}]
  %s6 = sld [smem:[#allocation0]]
  $region73: #{tpu_custom_call.1} parent=0
    _
  %s8 = ssub.s32 1, %s6
  %s9 = scalar_select 0, %s8, %s6
  $region1: #{tpu_custom_call.1} parent=0
    #allocation4 [shape = 'u8[16384]{0}', space=vmem, size = 0x4000, scoped, tag = 'input window, operand 0']
    #allocation5 [shape = 's32[2]{0}', space=sflag, size = 0x8, scoped, tag = 'scoped memory for tpu_custom_call.1']
    #allocation6 [shape = 's32[2]{0}', space=sflag, size = 0x8, scoped, tag = 'scoped memory for tpu_custom_call.1']
    #allocation7 [shape = 'u8[65536]{0}', space=vmem, size = 0x10000, scoped, tag = 'input window, operand 1, single buffered']
    #allocation8 [shape = 's32[1]{0}', space=sflag, size = 0x4, scoped, tag = 'scoped memory for tpu_custom_call.1']
    #allocation9 [shape = 'u8[131072]{0}', space=vmem, size = 0x20000, scoped, tag = 'input window, operand 3, single buffered']
    #allocation10 [shape = 'u8[16384]{0}', space=vmem, size = 0x4000, scoped, tag = 'output window, operand 0']
    %10 = vsyncpa [#allocation5], 0
    %s11 = scalar_lea.sflag [#allocation5], 1
    %12 = vsyncpa %s11, 0
    %13 = vsyncpa [#allocation8], 0
    %14 = vsyncpa [#allocation6], 0
    %s15 = scalar_lea.sflag [#allocation6], 1
    %16 = vsyncpa %s15, 0
    loop: start=0, step=1, limit=6
    $region2: #{tpu_custom_call.1} parent=1 // loop_pre_header
      _
    $region3: #{tpu_custom_call.1} parent=1 // loop_header
      %s18 = sphi 0, %s22
      %p19 = scmp.ge.s32.totalorder %s18, 6
      %s25 = sphi 0, %s37
      %s26 = sphi 0, %s33
      %s27 = sphi 0, %s25
      %s28 = sphi 0, %s26
      %s29 = sphi 0, %s27
      %s30 = sphi 0, %s28
      %s40 = sphi 0, %s42
      %s43 = sphi 0, %s40
      %s44 = sphi 0, %s43
      %s60 = sphi 0, %s44
      %s64 = sphi 0, %s64
      %s66 = sphi 0, %s64
      %s67 = sphi 0, %s66
      %s81 = sphi 0, %s67
      %s85 = sphi 0, %s85
      %s87 = sphi 0, %s85
      %s88 = sphi 0, %s87
      %s102 = sphi 0, %s88
      %s106 = sphi 0, %s106
      %s108 = sphi 0, %s106
      %s109 = sphi 0, %s108
      %s123 = sphi 0, %s109
      %s127 = sphi 0, %s127
      %s129 = sphi 0, %s127
      %s130 = sphi 0, %s129
      %s144 = sphi 0, %s130
      %s150 = sphi 0, %s152
      %s153 = sphi 0, %s150
      %s154 = sphi 0, %s153
      %s170 = sphi 0, %s154
    $region4: #{tpu_custom_call.1} parent=1 // loop_header_branch
      %21 = sbr.rel (%p19) target = $region8
    $region5: #{tpu_custom_call.1} parent=1 // loop_body
      %s23 = ssub.s32 %s18, 1
      %s24 = ssub.s32 %s18, 2
      %s31 = sadd.s32 1, %s26
      %p32 = scmp.ge.s32.totalorder %s31, 2
      %s33 = scalar_select %p32, 0, %s31
      %s34 = sadd.s32 1, %s25
      %s35 = scalar_select %p32, %s34, %s25
      %p36 = scmp.ge.s32.totalorder %s35, 2
      %s37 = scalar_select %p36, 0, %s35
      %s38 = ssub.s32 %s25, %s37
      %p39 = scmp.eq.s32.totalorder %s38, 0
      %s41 = sadd.s32 %s40, 1
      %s42 = scalar_select %p39, %s40, %s41
      %p45 = pneg %p39
      %p46 = scmp.eq.s32.totalorder %s18, 3
      %p47 = por %p45, %p46
      %p48 = scmp.ne.s32.totalorder %s40, %s43
      %p49 = scmp.eq.s32.totalorder %s18, 0
      %p50 = por %p48, %p49
      %p51 = scmp.ne.s32.totalorder %s40, %s43
      %p52 = scmp.eq.s32.totalorder %s23, 3
      %p53 = por %p51, %p52
      %p54 = scmp.ne.s32.totalorder %s43, %s44
      %p55 = scmp.eq.s32.totalorder %s23, 0
      %p56 = por %p54, %p55
      %p57 = scmp.ne.s32.totalorder %s43, %s44
      %p58 = scmp.eq.s32.totalorder %s24, 3
      %p59 = por %p57, %p58
      %p61 = scmp.ne.s32.totalorder %s44, %s60
      %p62 = scmp.eq.s32.totalorder %s24, 0
      %p63 = por %p61, %p62
      %s65 = sadd.s32 %s64, 1
      %p68 = scmp.eq.s32.totalorder %s18, 3
      %p69 = scmp.ne.s32.totalorder %s64, %s66
      %p70 = scmp.eq.s32.totalorder %s18, 0
      %p71 = por %p69, %p70
      %p72 = scmp.ne.s32.totalorder %s64, %s66
      %p73 = scmp.eq.s32.totalorder %s23, 3
      %p74 = por %p72, %p73
      %p75 = scmp.ne.s32.totalorder %s66, %s67
      %p76 = scmp.eq.s32.totalorder %s23, 0
      %p77 = por %p75, %p76
      %p78 = scmp.ne.s32.totalorder %s66, %s67
      %p79 = scmp.eq.s32.totalorder %s24, 3
      %p80 = por %p78, %p79
      %p82 = scmp.ne.s32.totalorder %s67, %s81
      %p83 = scmp.eq.s32.totalorder %s24, 0
      %p84 = por %p82, %p83
      %s86 = sadd.s32 %s85, 1
      %p89 = scmp.eq.s32.totalorder %s18, 3
      %p90 = scmp.ne.s32.totalorder %s85, %s87
      %p91 = scmp.eq.s32.totalorder %s18, 0
      %p92 = por %p90, %p91
      %p93 = scmp.ne.s32.totalorder %s85, %s87
      %p94 = scmp.eq.s32.totalorder %s23, 3
      %p95 = por %p93, %p94
      %p96 = scmp.ne.s32.totalorder %s87, %s88
      %p97 = scmp.eq.s32.totalorder %s23, 0
      %p98 = por %p96, %p97
      %p99 = scmp.ne.s32.totalorder %s87, %s88
      %p100 = scmp.eq.s32.totalorder %s24, 3
      %p101 = por %p99, %p100
      %p103 = scmp.ne.s32.totalorder %s88, %s102
      %p104 = scmp.eq.s32.totalorder %s24, 0
      %p105 = por %p103, %p104
      %s107 = sadd.s32 %s106, 1
      %p110 = scmp.eq.s32.totalorder %s18, 3
      %p111 = scmp.ne.s32.totalorder %s106, %s108
      %p112 = scmp.eq.s32.totalorder %s18, 0
      %p113 = por %p111, %p112
      %p114 = scmp.ne.s32.totalorder %s106, %s108
      %p115 = scmp.eq.s32.totalorder %s23, 3
      %p116 = por %p114, %p115
      %p117 = scmp.ne.s32.totalorder %s108, %s109
      %p118 = scmp.eq.s32.totalorder %s23, 0
      %p119 = por %p117, %p118
      %p120 = scmp.ne.s32.totalorder %s108, %s109
      %p121 = scmp.eq.s32.totalorder %s24, 3
      %p122 = por %p120, %p121
      %p124 = scmp.ne.s32.totalorder %s109, %s123
      %p125 = scmp.eq.s32.totalorder %s24, 0
      %p126 = por %p124, %p125
      %s128 = sadd.s32 %s127, 1
      %p131 = scmp.eq.s32.totalorder %s18, 3
      %p132 = scmp.ne.s32.totalorder %s127, %s129
      %p133 = scmp.eq.s32.totalorder %s18, 0
      %p134 = por %p132, %p133
      %p135 = scmp.ne.s32.totalorder %s127, %s129
      %p136 = scmp.eq.s32.totalorder %s23, 3
      %p137 = por %p135, %p136
      %p138 = scmp.ne.s32.totalorder %s129, %s130
      %p139 = scmp.eq.s32.totalorder %s23, 0
      %p140 = por %p138, %p139
      %p141 = scmp.ne.s32.totalorder %s129, %s130
      %p142 = scmp.eq.s32.totalorder %s24, 3
      %p143 = por %p141, %p142
      %p145 = scmp.ne.s32.totalorder %s130, %s144
      %p146 = scmp.eq.s32.totalorder %s24, 0
      %p147 = por %p145, %p146
      %s148 = ssub.s32 %s25, %s37
      %p149 = scmp.eq.s32.totalorder %s148, 0
      %s151 = sadd.s32 %s150, 1
      %s152 = scalar_select %p149, %s150, %s151
      %p155 = pneg %p149
      %p156 = scmp.eq.s32.totalorder %s18, 3
      %p157 = por %p155, %p156
      %p158 = scmp.ne.s32.totalorder %s150, %s153
      %p159 = scmp.eq.s32.totalorder %s18, 0
      %p160 = por %p158, %p159
      %p161 = scmp.ne.s32.totalorder %s150, %s153
      %p162 = scmp.eq.s32.totalorder %s23, 3
      %p163 = por %p161, %p162
      %p164 = scmp.ne.s32.totalorder %s153, %s154
      %p165 = scmp.eq.s32.totalorder %s23, 0
      %p166 = por %p164, %p165
      %p167 = scmp.ne.s32.totalorder %s153, %s154
      %p168 = scmp.eq.s32.totalorder %s24, 3
      %p169 = por %p167, %p168
      %p171 = scmp.ne.s32.totalorder %s154, %s170
      %p172 = scmp.eq.s32.totalorder %s24, 0
      %p173 = por %p171, %p172
      %p174 = scmp.le.s32.totalorder 1, %s18
      %p175 = scmp.lt.s32.totalorder %s18, 5
      %p176 = pnand %p174, %p175
      %p177 = pneg %p176
      // Predicated region
      $region9: #{tpu_custom_call.1} parent=5 // pred_check
        _
      $region10: #{tpu_custom_call.1} parent=5 // pred_check_branch
        %179 = sbr.rel (%p176) target = $region12
      $region11: #{tpu_custom_call.1} parent=5 // pred_region
        %s180 = ssub.s32 %s18, 1
        // Predicated region
        $region13: #{tpu_custom_call.1} parent=11 // pred_check
          %p181 = pneg %p77
        $region14: #{tpu_custom_call.1} parent=11 // pred_check_branch
          %183 = sbr.rel (%p181) target = $region16
        $region15: #{tpu_custom_call.1} parent=11 // pred_region
          %185 = vsyncadd [#allocation8], 0
          %s186 = sshll.u32 %s1, 4
          %s187 = int_to_ptr.hbm [resolvable:$true] %s186
          %s188 = sshll.u32 [#allocation7], 4
          %s189 = int_to_ptr.vmem [resolvable:$true] %s188
          %194 = dma.hbm_to_vmem [thread:$0]  %s187, 2048, %s189, [#allocation8], 128, 128, 8
        $region16: #{tpu_custom_call.1} parent=11 // pred_fallthru
          _
        // Predicated region
        $region17: #{tpu_custom_call.1} parent=11 // pred_check
          %p195 = pneg %p98
        $region18: #{tpu_custom_call.1} parent=11 // pred_check_branch
          %197 = sbr.rel (%p195) target = $region20
        $region19: #{tpu_custom_call.1} parent=11 // pred_region
          _
        $region20: #{tpu_custom_call.1} parent=11 // pred_fallthru
          _
        // Predicated region
        $region21: #{tpu_custom_call.1} parent=11 // pred_check
          %p198 = pneg %p119
        $region22: #{tpu_custom_call.1} parent=11 // pred_check_branch
          %200 = sbr.rel (%p198) target = $region24
        $region23: #{tpu_custom_call.1} parent=11 // pred_region
          %202 = vsyncadd [#allocation8], 0
          %s203 = sshll.u32 %s3, 4
          %s204 = int_to_ptr.hbm [resolvable:$true] %s203
          %s205 = sshll.u32 [#allocation9], 4
          %s206 = int_to_ptr.vmem [resolvable:$true] %s205
          %211 = dma.hbm_to_vmem [thread:$0]  %s204, 4096, %s206, [#allocation8], 256, 256, 16
        $region24: #{tpu_custom_call.1} parent=11 // pred_fallthru
          _
        // Predicated region
        $region25: #{tpu_custom_call.1} parent=11 // pred_check
          %p212 = pneg %p140
        $region26: #{tpu_custom_call.1} parent=11 // pred_check_branch
          %214 = sbr.rel (%p212) target = $region28
        $region27: #{tpu_custom_call.1} parent=11 // pred_region
          _
        $region28: #{tpu_custom_call.1} parent=11 // pred_fallthru
          _
      $region12: #{tpu_custom_call.1} parent=5 // pred_fallthru
        _
      %p215 = scmp.lt.s32.totalorder %s18, 4
      // Predicated region
      $region29: #{tpu_custom_call.1} parent=5 // pred_check
        %p216 = pneg %p215
      $region30: #{tpu_custom_call.1} parent=5 // pred_check_branch
        %218 = sbr.rel (%p216) target = $region32
      $region31: #{tpu_custom_call.1} parent=5 // pred_region
        // Predicated region
        $region33: #{tpu_custom_call.1} parent=31 // pred_check
          %p219 = pneg %p50
        $region34: #{tpu_custom_call.1} parent=31 // pred_check_branch
          %221 = sbr.rel (%p219) target = $region36
        $region35: #{tpu_custom_call.1} parent=31 // pred_region
          %s222 = sand.u32 %s40, 1
          %s223 = scalar_lea.sflag [#allocation5], %s222
          %s224 = sand.u32 %s40, 1
          %s225 = smul.addr %s224, 16
          %s226 = scalar_lea.vmem [#allocation4], %s225
          %228 = vsyncadd %s223, 0
          %s229 = smul.addr %s25, 2
          %s230 = smul.addr %s229, 8
          %s231 = scalar_lea.hbm %s0, %s230
          %s232 = sshll.u32 %s231, 4
          %s233 = int_to_ptr.hbm [resolvable:$true] %s232
          %s234 = sshll.u32 %s226, 4
          %s235 = int_to_ptr.vmem [resolvable:$true] %s234
          %240 = dma.hbm_to_vmem [thread:$0]  %s233, 256, %s235, %s223, 128, 128, 8
        $region36: #{tpu_custom_call.1} parent=31 // pred_fallthru
          _
      $region32: #{tpu_custom_call.1} parent=5 // pred_fallthru
        _
      %p241 = scmp.le.s32.totalorder 1, %s18
      %p242 = scmp.lt.s32.totalorder %s18, 5
      %p243 = pnand %p241, %p242
      %p244 = pneg %p243
      // Predicated region
      $region37: #{tpu_custom_call.1} parent=5 // pred_check
        _
      $region38: #{tpu_custom_call.1} parent=5 // pred_check_branch
        %246 = sbr.rel (%p243) target = $region40
      $region39: #{tpu_custom_call.1} parent=5 // pred_region
        %s247 = ssub.s32 %s18, 1
        %s248 = sand.u32 %s43, 1
        %s249 = scalar_lea.sflag [#allocation5], %s248
        %s250 = sand.u32 %s43, 1
        %s251 = smul.addr %s250, 16
        %s252 = scalar_lea.vmem [#allocation4], %s251
        // Predicated region
        $region41: #{tpu_custom_call.1} parent=39 // pred_check
          %p253 = pneg %p56
        $region42: #{tpu_custom_call.1} parent=39 // pred_check_branch
          %255 = sbr.rel (%p253) target = $region44
        $region43: #{tpu_custom_call.1} parent=39 // pred_region
          %257 = dma.done %s249, 256
        $region44: #{tpu_custom_call.1} parent=39 // pred_fallthru
          _
        // Predicated region
        $region45: #{tpu_custom_call.1} parent=39 // pred_check
          %p258 = pneg %p77
        $region46: #{tpu_custom_call.1} parent=39 // pred_check_branch
          %260 = sbr.rel (%p258) target = $region48
        $region47: #{tpu_custom_call.1} parent=39 // pred_region
          %262 = dma.done [#allocation8], 2048
        $region48: #{tpu_custom_call.1} parent=39 // pred_fallthru
          _
        // Predicated region
        $region49: #{tpu_custom_call.1} parent=39 // pred_check
          %p263 = pneg %p119
        $region50: #{tpu_custom_call.1} parent=39 // pred_check_branch
          %265 = sbr.rel (%p263) target = $region52
        $region51: #{tpu_custom_call.1} parent=39 // pred_region
          %267 = dma.done [#allocation8], 4096
        $region52: #{tpu_custom_call.1} parent=39 // pred_fallthru
          _
        %s268 = sand.u32 %s43, 1
        %s269 = scalar_lea.sflag [#allocation5], %s268
        %s270 = sand.u32 %s43, 1
        %s271 = smul.addr %s270, 16
        %s272 = scalar_lea.vmem [#allocation4], %s271
        %p273 = pneg %p56
        %p274 = pneg %p53
        %p275 = pneg %p77
        %p276 = pneg %p74
        %p277 = pneg %p98
        %p278 = pneg %p95
        %p279 = pneg %p119
        %p280 = pneg %p116
        %p281 = pneg %p140
        %p282 = pneg %p137
        %p283 = pneg %p166
        %p284 = pneg %p163
        %s285 = sand.u32 %s153, 1
        %s286 = scalar_lea.sflag [#allocation6], %s285
        %s287 = sand.u32 %s153, 1
        %s288 = smul.addr %s287, 16
        %s289 = scalar_lea.vmem [#allocation10], %s288
        %p290 = scmp.eq.s32.totalorder %s28, 0
        // Predicated region
        $region53: #{tpu_custom_call.1} parent=39 // pred_check
          %p291 = pneg %p290
        $region54: #{tpu_custom_call.1} parent=39 // pred_check_branch
          %293 = sbr.rel (%p291) target = $region56
        $region55: #{tpu_custom_call.1} parent=39 // pred_region
          %v294 = vld [vmem:[%s252] sm:$0xff]
          %v295 = vld [vmem:[%s252 + $0x8] sm:$0xff]
          %v296 = vld [vmem:[#allocation7] sm:$0xff]
          %v297 = vld [vmem:[#allocation7 + $0x8] sm:$0xff]
          %v298 = vld [vmem:[#allocation7 + $0x10] sm:$0xff]
          %v299 = vld [vmem:[#allocation7 + $0x18] sm:$0xff]
          %v300 = vld [vmem:[#allocation7 + $0x20] sm:$0xff]
          %v301 = vld [vmem:[#allocation7 + $0x28] sm:$0xff]
          %v302 = vld [vmem:[#allocation7 + $0x30] sm:$0xff]
          %v303 = vld [vmem:[#allocation7 + $0x38] sm:$0xff]
          %v304 = vld [vmem:[#allocation7 + $0x40] sm:$0xff]
          %v305 = vld [vmem:[#allocation7 + $0x48] sm:$0xff]
          %v306 = vld [vmem:[#allocation7 + $0x50] sm:$0xff]
          %v307 = vld [vmem:[#allocation7 + $0x58] sm:$0xff]
          %v308 = vld [vmem:[#allocation7 + $0x60] sm:$0xff]
          %v309 = vld [vmem:[#allocation7 + $0x68] sm:$0xff]
          %v310 = vld [vmem:[#allocation7 + $0x70] sm:$0xff]
          %v311 = vld [vmem:[#allocation7 + $0x78] sm:$0xff]
          %v312 = vld [vmem:[%s2] sm:$0x1]
          %v314 = vperm.slane %v312, 0
          %316 = vmatpush.msra.mxu0 %v311
          %317 = vmatpush.msra.mxu0 %v310
          %318 = vmatpush.msra.mxu0 %v309
          %319 = vmatpush.msra.mxu0 %v308
          %320 = vmatpush.msra.mxu0 %v307
          %321 = vmatpush.msra.mxu0 %v306
          %322 = vmatpush.msra.mxu0 %v305
          %323 = vmatpush.msra.mxu0 %v304
          %324 = vmatpush.msra.mxu0 %v303
          %325 = vmatpush.msra.mxu0 %v302
          %326 = vmatpush.msra.mxu0 %v301
          %327 = vmatpush.msra.mxu0 %v300
          %328 = vmatpush.msra.mxu0 %v299
          %329 = vmatpush.msra.mxu0 %v298
          %330 = vmatpush.msra.mxu0 %v297
          %331 = vmatpush.msra.mxu0 %v296
          %332 = vmatmul.f32.gmra.mxu0 %v294
          %v333 = vpop.f32.mrf.mxu0
          %v334 = vadd.f32 %v314, %v333
          %335 = vmatmul.f32.gmra.mxu0 %v295
          %v336 = vpop.f32.mrf.mxu0
          %v337 = vadd.f32 %v314, %v336
          %338 = vdwg.mxu0
          %339 = vst [vmem:[#allocation2] sm:$0xff] %v334
          %340 = vst [vmem:[#allocation2 + $0x8] sm:$0xff] %v337
          %341 = vst [vmem:[#allocation3] sm:$0xff] 0.0
          %342 = vst [vmem:[#allocation3 + $0x8] sm:$0xff] 0.0
        $region56: #{tpu_custom_call.1} parent=39 // pred_fallthru
          _
        %s343 = smul.u32 %s28, 8
        %s344 = scalar_lea.vmem %s252, %s343 [#allocation4]
        %v345 = vld [vmem:[%s344] sm:$0xff]
        %v346 = vld [vmem:[#allocation9] sm:$0xff]
        %v347 = vld [vmem:[#allocation9 + $0x8] sm:$0xff]
        %v348 = vld [vmem:[#allocation9 + $0x10] sm:$0xff]
        %v349 = vld [vmem:[#allocation9 + $0x18] sm:$0xff]
        %v350 = vld [vmem:[#allocation9 + $0x20] sm:$0xff]
        %v351 = vld [vmem:[#allocation9 + $0x28] sm:$0xff]
        %v352 = vld [vmem:[#allocation9 + $0x30] sm:$0xff]
        %v353 = vld [vmem:[#allocation9 + $0x38] sm:$0xff]
        %v354 = vld [vmem:[#allocation9 + $0x40] sm:$0xff]
        %v355 = vld [vmem:[#allocation9 + $0x48] sm:$0xff]
        %v356 = vld [vmem:[#allocation9 + $0x50] sm:$0xff]
        %v357 = vld [vmem:[#allocation9 + $0x58] sm:$0xff]
        %v358 = vld [vmem:[#allocation9 + $0x60] sm:$0xff]
        %v359 = vld [vmem:[#allocation9 + $0x68] sm:$0xff]
        %v360 = vld [vmem:[#allocation9 + $0x70] sm:$0xff]
        %v361 = vld [vmem:[#allocation9 + $0x78] sm:$0xff]
        %v362 = vld [vmem:[#allocation9 + $0x80] sm:$0xff]
        %v363 = vld [vmem:[#allocation9 + $0x88] sm:$0xff]
        %v364 = vld [vmem:[#allocation9 + $0x90] sm:$0xff]
        %v365 = vld [vmem:[#allocation9 + $0x98] sm:$0xff]
        %v366 = vld [vmem:[#allocation9 + $0xa0] sm:$0xff]
        %v367 = vld [vmem:[#allocation9 + $0xa8] sm:$0xff]
        %v368 = vld [vmem:[#allocation9 + $0xb0] sm:$0xff]
        %v369 = vld [vmem:[#allocation9 + $0xb8] sm:$0xff]
        %v370 = vld [vmem:[#allocation9 + $0xc0] sm:$0xff]
        %v371 = vld [vmem:[#allocation9 + $0xc8] sm:$0xff]
        %v372 = vld [vmem:[#allocation9 + $0xd0] sm:$0xff]
        %v373 = vld [vmem:[#allocation9 + $0xd8] sm:$0xff]
        %v374 = vld [vmem:[#allocation9 + $0xe0] sm:$0xff]
        %v375 = vld [vmem:[#allocation9 + $0xe8] sm:$0xff]
        %v376 = vld [vmem:[#allocation9 + $0xf0] sm:$0xff]
        %v377 = vld [vmem:[#allocation9 + $0xf8] sm:$0xff]
        %v378 = vld [vmem:[%s4] sm:$0x3]
        %v380 = vperm.slane %v378, 0
        %v381 = vperm.slane %v378, 1
        %384 = vmatpush.msra.mxu0 %v376
        %385 = vmatpush.msra.mxu0 %v374
        %386 = vmatpush.msra.mxu0 %v372
        %387 = vmatpush.msra.mxu0 %v370
        %388 = vmatpush.msra.mxu0 %v368
        %389 = vmatpush.msra.mxu0 %v366
        %390 = vmatpush.msra.mxu0 %v364
        %391 = vmatpush.msra.mxu0 %v362
        %392 = vmatpush.msra.mxu0 %v360
        %393 = vmatpush.msra.mxu0 %v358
        %394 = vmatpush.msra.mxu0 %v356
        %395 = vmatpush.msra.mxu0 %v354
        %396 = vmatpush.msra.mxu0 %v352
        %397 = vmatpush.msra.mxu0 %v350
        %398 = vmatpush.msra.mxu0 %v348
        %399 = vmatpush.msra.mxu0 %v346
        %400 = vmatmul.f32.gmra.mxu0 %v345
        %v401 = vpop.f32.mrf.mxu0
        %v402 = vadd.f32 %v380, %v401
        %403 = vdwg.mxu0
        %404 = vmatpush.msra.mxu0 %v377
        %405 = vmatpush.msra.mxu0 %v375
        %406 = vmatpush.msra.mxu0 %v373
        %407 = vmatpush.msra.mxu0 %v371
        %408 = vmatpush.msra.mxu0 %v369
        %409 = vmatpush.msra.mxu0 %v367
        %410 = vmatpush.msra.mxu0 %v365
        %411 = vmatpush.msra.mxu0 %v363
        %412 = vmatpush.msra.mxu0 %v361
        %413 = vmatpush.msra.mxu0 %v359
        %414 = vmatpush.msra.mxu0 %v357
        %415 = vmatpush.msra.mxu0 %v355
        %416 = vmatpush.msra.mxu0 %v353
        %417 = vmatpush.msra.mxu0 %v351
        %418 = vmatpush.msra.mxu0 %v349
        %419 = vmatpush.msra.mxu0 %v347
        %420 = vmatmul.f32.gmra.mxu0 %v345
        %v421 = vpop.f32.mrf.mxu0
        %v422 = vadd.f32 %v381, %v421
        %423 = vdwg.mxu0
        %v424 = vld [vmem:[#allocation2] sm:$0xff]
        %v425 = vld [vmem:[#allocation2 + $0x8] sm:$0xff]
        %426 = vmatpush.xpose.msra.mxu0 0.0
        %427 = vmatpush.xpose.msra.mxu0 0.0
        %428 = vmatpush.xpose.msra.mxu0 0.0
        %429 = vmatpush.xpose.msra.mxu0 0.0
        %430 = vmatpush.xpose.msra.mxu0 0.0
        %431 = vmatpush.xpose.msra.mxu0 0.0
        %432 = vmatpush.xpose.msra.mxu0 0.0
        %433 = vmatpush.xpose.msra.mxu0 0.0
        %434 = vmatpush.xpose.msra.mxu0 0.0
        %435 = vmatpush.xpose.msra.mxu0 0.0
        %436 = vmatpush.xpose.msra.mxu0 0.0
        %437 = vmatpush.xpose.msra.mxu0 0.0
        %438 = vmatpush.xpose.msra.mxu0 0.0
        %439 = vmatpush.xpose.msra.mxu0 0.0
        %440 = vmatpush.xpose.msra.mxu0 0.0
        %441 = vmatpush.xpose.msra.mxu0 %v402
        %442 = vmatmul.f32.gmra.mxu0 %v424
        %v443 = vpop.f32.mrf.mxu0
        %v444 = vadd.f32 0.0, %v443
        %445 = vmatmul.f32.gmra.mxu0 %v425
        %v446 = vpop.f32.mrf.mxu0
        %v447 = vadd.f32 0.0, %v446
        %448 = vdwg.mxu0
        %v449 = vlaneseq
        %v450 = vshrl.u32 %v449, 7
        %v451 = vadd.s32 %v450, 8
        %v452 = vlaneseq
        %v453 = vand.u32 %v452, 127
        %v454 = vstv %s343
        %v455 = vadd.s32 %v453, %v454
        %vm456 = vcmp.le.s32.totalorder %v455, %v450
        %vm457 = vcmp.le.s32.totalorder %v455, %v451
        %v458 = vsel %vm456, %v444, -inf
        %v459 = vsel %vm457, %v447, -inf
        %vm460 = vcmask 64512
        %v461 = vsel %vm460, %v458, -inf
        %v462 = vsel %vm460, %v459, -inf
        %v463 = vmax.f32 %v461, %v462
        %v464 = vrot.slane %v463, 4
        %v465 = vmax.f32 %v463, %v464
        %v466 = vrot.slane %v465, 2
        %v467 = vmax.f32 %v465, %v466
        %v468 = vrot.slane %v467, 1
        %v469 = vmax.f32 %v467, %v468
        %v470 = vsub.f32 %v458, %v469
        %v471 = vsub.f32 %v459, %v469
        %v472 = vmul.f32 %v470, 1.442695
        %v473 = vpow.pop %v472
        %v474 = vmul.f32 %v471, 1.442695
        %v475 = vpow.pop %v474
        %v476 = vsel %vm460, %v473, 0.0
        %v477 = vsel %vm460, %v475, 0.0
        %v478 = vadd.f32 %v476, %v477
        %v479 = vrot.slane %v478, 4
        %v480 = vadd.f32 %v478, %v479
        %v481 = vrot.slane %v480, 2
        %v482 = vadd.f32 %v480, %v481
        %v483 = vrot.slane %v482, 1
        %v484 = vadd.f32 %v482, %v483
        %v485 = vrcp.pop %v484
        %v486 = vmul.f32 %v484, %v485
        %v487 = vsub.f32 1.0, %v486
        %v488 = vmul.f32 %v485, %v487
        %v489 = vadd.f32 %v485, %v488
        %vm490 = vweird.f32 %v484
        %vm491 = vweird.f32 %v485
        %vm492 = vmor %vm490, %vm491
        %v493 = vsel %vm492, %v485, %v489
        %v494 = vand.u32 2147483647, %v484
        %vm495 = vcmp.eq.f32.partialorder %v494, 8.507059e+37
        %v496 = vand.u32 %v484, 2147483648
        %v497 = vor.u32 1.1754944e-38, %v496
        %v498 = vsel %vm495, %v497, %v493
        %v499 = vmul.f32 0.088388346, %v498
        %v500 = vmul.f32 %v473, %v499
        %v501 = vmul.f32 %v475, %v499
        %v502 = vld [vmem:[#allocation3] sm:$0xff]
        %v503 = vld [vmem:[#allocation3 + $0x8] sm:$0xff]
        %v505 = vsel %vm460, %v500, 0
        %v508 = vsel %vm460, %v501, 0
        %510 = vmatpush.msra.mxu0 0.0
        %511 = vmatpush.msra.mxu0 0.0
        %512 = vmatpush.msra.mxu0 0.0
        %513 = vmatpush.msra.mxu0 0.0
        %514 = vmatpush.msra.mxu0 0.0
        %515 = vmatpush.msra.mxu0 0.0
        %516 = vmatpush.msra.mxu0 0.0
        %517 = vmatpush.msra.mxu0 0.0
        %518 = vmatpush.msra.mxu0 0.0
        %519 = vmatpush.msra.mxu0 0.0
        %520 = vmatpush.msra.mxu0 0.0
        %521 = vmatpush.msra.mxu0 0.0
        %522 = vmatpush.msra.mxu0 0.0
        %523 = vmatpush.msra.mxu0 0.0
        %524 = vmatpush.msra.mxu0 0.0
        %525 = vmatpush.msra.mxu0 %v422
        %526 = vmatmul.f32.gmra.mxu0 %v505
        %v527 = vpop.f32.mrf.mxu0
        %v528 = vadd.f32 0.0, %v527
        %529 = vmatmul.f32.gmra.mxu0 %v508
        %v530 = vpop.f32.mrf.mxu0
        %v531 = vadd.f32 0.0, %v530
        %532 = vdwg.mxu0
        %v533 = vadd.f32 %v502, %v528
        %v534 = vadd.f32 %v503, %v531
        %535 = vst [vmem:[#allocation3] sm:$0xff] %v533
        %536 = vst [vmem:[#allocation3 + $0x8] sm:$0xff] %v534
        %p537 = scmp.eq.s32.totalorder %s28, 1
        // Predicated region
        $region57: #{tpu_custom_call.1} parent=39 // pred_check
          %p538 = pneg %p537
        $region58: #{tpu_custom_call.1} parent=39 // pred_check_branch
          %540 = sbr.rel (%p538) target = $region60
        $region59: #{tpu_custom_call.1} parent=39 // pred_region
          %v541 = vld [vmem:[%s252] sm:$0xff]
          %v542 = vld [vmem:[%s252 + $0x8] sm:$0xff]
          %v543 = vld [vmem:[#allocation3] sm:$0xff]
          %v544 = vld [vmem:[#allocation3 + $0x8] sm:$0xff]
          %v545 = vadd.f32 %v541, %v543
          %v546 = vadd.f32 %v542, %v544
          %547 = vst [vmem:[%s289] sm:$0xff] %v545
          %548 = vst [vmem:[%s289 + $0x8] sm:$0xff] %v546
        $region60: #{tpu_custom_call.1} parent=39 // pred_fallthru
          _
        %s549 = sand.u32 %s153, 1
        %s550 = scalar_lea.sflag [#allocation6], %s549
        %s551 = sand.u32 %s153, 1
        %s552 = smul.addr %s551, 16
        %s553 = scalar_lea.vmem [#allocation10], %s552
        // Predicated region
        $region61: #{tpu_custom_call.1} parent=39 // pred_check
          %p554 = pneg %p163
        $region62: #{tpu_custom_call.1} parent=39 // pred_check_branch
          %556 = sbr.rel (%p554) target = $region64
        $region63: #{tpu_custom_call.1} parent=39 // pred_region
          %558 = vsyncadd %s550, 0
          %s559 = smul.addr %s27, 2
          %s560 = smul.addr %s559, 8
          %s561 = scalar_lea.hbm %s5, %s560
          %s562 = sshll.u32 %s553, 4
          %s563 = int_to_ptr.vmem [resolvable:$true] %s562
          %s564 = sshll.u32 %s561, 4
          %s565 = int_to_ptr.hbm [resolvable:$true] %s564
          %570 = dma.vmem_to_hbm [thread:$0]  %s563, 256, %s565, %s550, 128, 128, 8
        $region64: #{tpu_custom_call.1} parent=39 // pred_fallthru
          _
      $region40: #{tpu_custom_call.1} parent=5 // pred_fallthru
        _
      %p571 = scmp.le.s32.totalorder 2, %s18
      // Predicated region
      $region65: #{tpu_custom_call.1} parent=5 // pred_check
        %p572 = pneg %p571
      $region66: #{tpu_custom_call.1} parent=5 // pred_check_branch
        %574 = sbr.rel (%p572) target = $region68
      $region67: #{tpu_custom_call.1} parent=5 // pred_region
        %s575 = ssub.s32 %s18, 2
        // Predicated region
        $region69: #{tpu_custom_call.1} parent=67 // pred_check
          %p576 = pneg %p169
        $region70: #{tpu_custom_call.1} parent=67 // pred_check_branch
          %578 = sbr.rel (%p576) target = $region72
        $region71: #{tpu_custom_call.1} parent=67 // pred_region
          %s579 = sand.u32 %s154, 1
          %s580 = scalar_lea.sflag [#allocation6], %s579
          %s581 = sand.u32 %s154, 1
          %s582 = smul.addr %s581, 16
          %s583 = scalar_lea.vmem [#allocation10], %s582
          %585 = dma.done %s580, 256
        $region72: #{tpu_custom_call.1} parent=67 // pred_fallthru
          _
      $region68: #{tpu_custom_call.1} parent=5 // pred_fallthru
        _
    $region6: #{tpu_custom_call.1} parent=1 // loop_footer
      %s22 = sadd.s32 1, %s18
    $region7: #{tpu_custom_call.1} parent=1 // loop_footer_branch
      %17 = sbr.rel target = $region3
    $region8: #{tpu_custom_call.1} parent=1 // loop_exit
      _
    %586 = vsyncpa [#allocation5], 1
    %s587 = scalar_lea.sflag [#allocation5], 1
    %588 = vsyncpa %s587, 1
    %589 = vsyncpa [#allocation8], 1
    %590 = vsyncpa [#allocation6], 1
    %s591 = scalar_lea.sflag [#allocation6], 1
    %592 = vsyncpa %s591, 1

</llo_original>
